<compile_context>
chip_gen: v5e
topology: v5e:2x2
jax: 0.10.0
libtpu: 0.0.40
codegen_flags: <defaults>
</compile_context>

<pallas_src>
import functools
from typing import NamedTuple

import jax
import jax.numpy as jnp
from jax.experimental import pallas as pl
from jax.experimental.pallas import tpu as pltpu


# --------------------------------------------------------------------------
# Hardware-generation helpers
# --------------------------------------------------------------------------

_PREFERRED_TM = {"v7x": 512, "v6e": 1024, "v5e": 256}


def _tpu_generation() -> str:
    try:
        kind = jax.devices()[0].device_kind.lower()
    except Exception:
        return "unknown"
    if "v6" in kind:
        return "v6e"
    if "v7" in kind or "7x" in kind:
        return "v7x"
    if "v5" in kind and ("lite" in kind or "5e" in kind):
        return "v5e"
    if "v5" in kind or "v4" in kind or "v3" in kind or "v2" in kind:
        return "v5e"  # conservative tiles for older / p-series chips
    return "unknown"


def _vmem_capacity_bytes() -> int:
    try:
        cap = int(getattr(pltpu.get_tpu_info(), "vmem_capacity_bytes", 0))
        if cap > 0:
            return cap
    except Exception:
        pass
    # v7x: 64 MiB per TensorCore; v5e/v6e: 128 MiB.
    return (64 << 20) if _tpu_generation() == "v7x" else (128 << 20)


# --------------------------------------------------------------------------
# Tile selection
# --------------------------------------------------------------------------

def _pick_tile(total, preferred, multiple):
    """Largest t <= preferred with total % t == 0 and t % multiple == 0,
    falling back to the full extent (always a legal block)."""
    t = min(preferred, total)
    t = (t // multiple) * multiple
    while t >= multiple:
        if total % t == 0:
            return t
        t -= multiple
    return total


def _vmem_needed(tm, ti, H, dtype, out_itemsize=None):
    """Double-buffered x / w12 / wc / out tiles + the f32 accumulator."""
    it = jnp.dtype(dtype).itemsize
    oit = it if out_itemsize is None else out_itemsize
    tiles = tm * H * it + H * 2 * ti * it + ti * H * it + tm * H * oit
    return 2 * tiles + tm * H * 4


def default_intermediate_tile(I):
    # ti = 512 -> up-proj N = 1024, down-proj K = 512: full MXU tiles on
    # v6e/v7x (256-multiples) and 128-multiples on v5e.  Never shrink ti to
    # save VMEM -- shrink tm instead.
    return _pick_tile(I, 512, 128)


def default_token_tile(T, H, ti, dtype, *, generation=None, vmem_budget=None,
                       out_itemsize=None):
    gen = generation if generation is not None else _tpu_generation()
    if vmem_budget is None:
        vmem_budget = _vmem_capacity_bytes() * 3 // 4
    sub = 16 if jnp.dtype(dtype).itemsize < 4 else 8   # bf16 needs (16,128) tiles
    tm = _pick_tile(T, min(_PREFERRED_TM.get(gen, 256), T), sub)
    # Shrink tm (never ti) until the double-buffered working set fits the budget.
    while tm > sub and _vmem_needed(tm, ti, H, dtype, out_itemsize) > vmem_budget:
        smaller = _pick_tile(T, tm - sub, sub)
        if smaller >= tm:
            break
        tm = smaller
    return tm


# --------------------------------------------------------------------------
# Weight packing (one-time, at weight-load time)
# --------------------------------------------------------------------------

class PackedQWenMLPWeights(NamedTuple):
    """w12: (H, 2*I), per I-tile layout [W1^T tile | W2^T tile];
    wc: (I, H) = c_proj^T; ti: the tile size the packing was built for."""
    w12: jax.Array
    wc: jax.Array
    ti: int


def pack_qwen_mlp_weights(w1, w2, c_proj, ti):
    """One-time weight prep (do at weight-load time, NOT per forward call).

    w1, w2:  (I, H)  PyTorch nn.Linear layout [out_features, in_features]
    c_proj:  (H, I)
    """
    I, H = w1.shape
    assert w2.shape == (I, H) and c_proj.shape == (H, I)
    assert I % ti == 0, "intermediate size must be divisible by ti"
    nk = I // ti
    w1_t = jnp.asarray(w1).T.reshape(H, nk, ti)
    w2_t = jnp.asarray(w2).T.reshape(H, nk, ti)
    w12 = jnp.concatenate([w1_t, w2_t], axis=2).reshape(H, 2 * I)
    return PackedQWenMLPWeights(w12=w12, wc=jnp.asarray(c_proj).T, ti=int(ti))


# --------------------------------------------------------------------------
# Kernel
# --------------------------------------------------------------------------

def _qwen_mlp_kernel(x_ref, w12_ref, wc_ref, o_ref, acc_ref, *, k_axis):
    # x_ref:   (tm, H)      token tile (resident across the k axis)
    # w12_ref: (H, 2*ti)    [W1^T tile | W2^T tile] fused along the lane axis
    # wc_ref:  (ti, H)      down-projection tile for this k's I slice
    # o_ref:   (tm, H)      output token tile (written at the last k step)
    # acc_ref: (tm, H) f32  VMEM accumulator, persistent across k
    k = pl.program_id(k_axis)

    x = x_ref[...]
    ti = wc_ref.shape[0]

    # One fused up-projection matmul: (tm, H) @ (H, 2*ti) on the MXU.
    a = jnp.dot(x, w12_ref[...], preferred_element_type=jnp.float32)
    a1 = a[:, :ti]
    a2 = a[:, ti:]

    # Gated SiLU in f32; exp and reciprocal both land on the EUP slot.
    sig = pl.reciprocal(1.0 + jnp.exp(-a2), approx=True)
    h = a1 * (a2 * sig)

    # Partial down-projection; cast gated activation back to the input dtype
    # before the MXU (deliberate precision choice; keeps bf16 MXU throughput,
    # expected ~1e-2 relative error in bf16 production vs an f32 reference).
    part = jnp.dot(h.astype(x.dtype), wc_ref[...],
                   preferred_element_type=jnp.float32)

    @pl.when(k == 0)
    def _():
        acc_ref[...] = part            # first k step: store (no zero-fill pass)

    @pl.when(k > 0)
    def _():
        acc_ref[...] += part

    @pl.when(k == pl.num_programs(k_axis) - 1)
    def _():
        o_ref[...] = acc_ref[...].astype(o_ref.dtype)


# --------------------------------------------------------------------------
# Wrappers
# --------------------------------------------------------------------------

def qwen_mlp_packed(x, packed: PackedQWenMLPWeights, *, tm=None, split_k=None):
    """x: (T, H); packed: PackedQWenMLPWeights built by pack_qwen_mlp_weights."""
    w12, wc, ti = packed.w12, packed.wc, int(packed.ti)
    T, H = x.shape
    assert w12.ndim == 2 and w12.shape[0] == H and w12.shape[1] % 2 == 0
    I = w12.shape[1] // 2
    assert wc.shape == (I, H), "wc must be c_proj^T with shape (I, H)"
    assert I % ti == 0, "packed ti must divide the intermediate size"
    nk = I // ti

    gen = _tpu_generation()
    cap = _vmem_capacity_bytes()
    budget = cap * 3 // 4                 # generation-aware budget (no hard 64 MiB cap)

    x_itemsize = jnp.dtype(x.dtype).itemsize
    if tm is None:
        tm = default_token_tile(T, H, ti, x.dtype, generation=gen, vmem_budget=budget)
    assert T % tm == 0, "token count must be divisible by tm"

    if split_k is None:
        # Decode-sized shapes on v7x: only one token tile would leave one of
        # the two TensorCores idle -> split the I reduction across the cores.
        split_k = (gen == "v7x" and T // tm == 1)
    split_k = bool(split_k) and nk >= 2 and nk % 2 == 0

    out_itemsize = 4 if split_k else x_itemsize
    needed = _vmem_needed(tm, ti, H, x.dtype, out_itemsize)
    vmem_limit = int(min(max(needed * 5 // 4, 32 << 20), budget))
    if vmem_limit < needed:               # never set a limit below the real need
        vmem_limit = int(min(needed * 9 // 8, cap))

    w_itemsize = jnp.dtype(w12.dtype).itemsize
    cost = pl.CostEstimate(
        flops=int(6 * T * H * I),                     # 2*T*H*(2I) + 2*T*I*H
        transcendentals=int(T * I),                   # exp in the SiLU gate
        bytes_accessed=int((T // tm) * 3 * H * I * w_itemsize   # weights re-streamed
                           + 2 * T * H * x_itemsize),            # per token tile
    )

    if not split_k:
        return pl.pallas_call(
            functools.partial(_qwen_mlp_kernel, k_axis=1),
            out_shape=jax.ShapeDtypeStruct((T, H), x.dtype),
            grid_spec=pltpu.PrefetchScalarGridSpec(
                num_scalar_prefetch=0,
                grid=(T // tm, nk),
                in_specs=[
                    pl.BlockSpec((tm, H), lambda i, k: (i, 0)),       # x tile
                    pl.BlockSpec((H, 2 * ti), lambda i, k: (0, k)),   # [W1^T|W2^T] tile
                    pl.BlockSpec((ti, H), lambda i, k: (k, 0)),       # Wc tile
                ],
                out_specs=pl.BlockSpec((tm, H), lambda i, k: (i, 0)),
                scratch_shapes=[pltpu.VMEM((tm, H), jnp.float32)],
            ),
            compiler_params=pltpu.CompilerParams(
                dimension_semantics=("parallel", "arbitrary"),
                vmem_limit_bytes=vmem_limit,
            ),
            cost_estimate=cost,
        )(x, w12, wc)

    # Split-K path: 2-way split of the I reduction across TensorCores.  Each
    # half produces a partial (T, H) f32 output; one trailing XLA add sums them.
    nk_half = nk // 2
    partials = pl.pallas_call(
        functools.partial(_qwen_mlp_kernel, k_axis=2),
        out_shape=jax.ShapeDtypeStruct((2, T, H), jnp.float32),
        grid_spec=pltpu.PrefetchScalarGridSpec(
            num_scalar_prefetch=0,
            grid=(2, T // tm, nk_half),
            in_specs=[
                pl.BlockSpec((tm, H), lambda c, i, k: (i, 0)),
                pl.BlockSpec((H, 2 * ti), lambda c, i, k: (0, c * nk_half + k)),
                pl.BlockSpec((ti, H), lambda c, i, k: (c * nk_half + k, 0)),
            ],
            out_specs=pl.BlockSpec((None, tm, H), lambda c, i, k: (c, i, 0)),
            scratch_shapes=[pltpu.VMEM((tm, H), jnp.float32)],
        ),
        compiler_params=pltpu.CompilerParams(
            dimension_semantics=("parallel", "parallel", "arbitrary"),
            vmem_limit_bytes=vmem_limit,
        ),
        cost_estimate=cost,
    )(x, w12, wc)
    return (partials[0] + partials[1]).astype(x.dtype)


def qwen_mlp(x, w1, w2, c_proj, *, tm=None, ti=None, split_k=None):
    """Convenience one-shot API (packs weights per call).
    In production, call pack_qwen_mlp_weights() once and reuse the packed struct."""
    I = w1.shape[0]
    if ti is None:
        ti = default_intermediate_tile(I)
    packed = pack_qwen_mlp_weights(w1, w2, c_proj, ti)
    return qwen_mlp_packed(x, packed, tm=tm, split_k=split_k)


def qwen_mlp_ref(x, w1, w2, c_proj):
    a1 = x @ w1.T
    a2 = x @ w2.T
    h = a1 * (a2 * jax.nn.sigmoid(a2))
    return h @ c_proj.T


# --------------------------------------------------------------------------
# Self-test
# --------------------------------------------------------------------------

if __name__ == "__main__":
    hidden_size = 128
    intermediate_size = 256
    tokens = 256  # batch*seq flattened

    key = jax.random.PRNGKey(0)
    kx, k1, k2, k3 = jax.random.split(key, 4)

    x = jax.random.normal(kx, (tokens, hidden_size), dtype=jnp.float32)
    # PyTorch nn.Linear weight shapes: [out_features, in_features]
    w1 = jax.random.normal(k1, (intermediate_size, hidden_size), jnp.float32) * 0.05
    w2 = jax.random.normal(k2, (intermediate_size, hidden_size), jnp.float32) * 0.05
    c_proj = jax.random.normal(k3, (hidden_size, intermediate_size), jnp.float32) * 0.05

    ref = qwen_mlp_ref(x, w1, w2, c_proj)

    # (1) Explicit small tiles: 2x2 grid (parallel token axis + I accumulation).
    packed128 = pack_qwen_mlp_weights(w1, w2, c_proj, ti=128)
    out = jax.block_until_ready(qwen_mlp_packed(x, packed128, tm=128))
    assert out.shape == (tokens, hidden_size)
    # Tolerance covers the approximate EUP reciprocal used in the SiLU gate.
    assert jnp.allclose(out, ref, atol=1e-2, rtol=1e-2), "f32 mismatch vs reference"

    # (2) Auto path: generation-aware tm / ti and VMEM budget.
    out_auto = jax.block_until_ready(qwen_mlp(x, w1, w2, c_proj))
    assert jnp.allclose(out_auto, ref, atol=1e-2, rtol=1e-2), "auto-tile mismatch"

    # (3) Forced split-K path (dual-TensorCore decode codepath on v7x); it is
    #     also correct -- just sequential -- on single-core generations.
    out_sk = jax.block_until_ready(
        qwen_mlp_packed(x, packed128, tm=tokens, split_k=True))
    assert jnp.allclose(out_sk, ref, atol=1e-2, rtol=1e-2), "split-K mismatch"

    # (4) bf16 production path: bf16 streamed weights, f32 accumulation.
    xb = x.astype(jnp.bfloat16)
    packed_b = pack_qwen_mlp_weights(w1.astype(jnp.bfloat16),
                                     w2.astype(jnp.bfloat16),
                                     c_proj.astype(jnp.bfloat16), ti=128)
    out_b = jax.block_until_ready(qwen_mlp_packed(xb, packed_b, tm=128))
    assert jnp.allclose(out_b.astype(jnp.float32), ref, atol=5e-2, rtol=5e-2), \
        "bf16 mismatch vs reference"

    print("KERNEL_OK")
</pallas_src>

<mosaic_0001>
module attributes {stable_mosaic.version = 11 : i64} {
  func.func @_qwen_mlp_kernel(%arg0: i32, %arg1: i32, %arg2: memref<128x128xf32, #tpu.memory_space<vmem>>, %arg3: memref<128x256xf32, #tpu.memory_space<vmem>>, %arg4: memref<128x128xf32, #tpu.memory_space<vmem>>, %arg5: memref<128x128xf32, #tpu.memory_space<vmem>>, %arg6: memref<128x128xf32, #tpu.memory_space<vmem>>) attributes {dimension_semantics = [#tpu.dimension_semantics<parallel>, #tpu.dimension_semantics<arbitrary>], iteration_bounds = array<i64: 2, 2>, scalar_prefetch = 0 : i64, scratch_operands = 1 : i64, tpu.core_type = #tpu.core_type<tc>, window_params = [{transform_indices = @transform_0, window_bounds = array<i64: 128, 128>}, {transform_indices = @transform_1, window_bounds = array<i64: 128, 256>}, {transform_indices = @transform_2, window_bounds = array<i64: 128, 128>}, {transform_indices = @transform_3, window_bounds = array<i64: 128, 128>}]} {
    %c0 = arith.constant 0 : index
    %c0_0 = arith.constant 0 : index
    %0 = vector.load %arg2[%c0, %c0_0] : memref<128x128xf32, #tpu.memory_space<vmem>>, vector<128x128xf32>
    %c0_1 = arith.constant 0 : index
    %c0_2 = arith.constant 0 : index
    %1 = vector.load %arg3[%c0_1, %c0_2] : memref<128x256xf32, #tpu.memory_space<vmem>>, vector<128x256xf32>
    %cst = arith.constant dense<0.000000e+00> : vector<128x256xf32>
    %2 = tpu.matmul %0, %1, %cst {dimension_numbers = #tpu.dot_dimension_numbers<[1], [0], [0], [1], [0, 0, 1, 1], [], []>} : vector<128x128xf32>, vector<128x256xf32>, vector<128x256xf32> -> vector<128x256xf32>
    %3 = vector.extract_strided_slice %2 {offsets = [0, 0], sizes = [128, 128], strides = [1, 1]} : vector<128x256xf32> to vector<128x128xf32>
    %4 = vector.extract_strided_slice %2 {offsets = [0, 128], sizes = [128, 128], strides = [1, 1]} : vector<128x256xf32> to vector<128x128xf32>
    %cst_3 = arith.constant 0.000000e+00 : f32
    %5 = vector.broadcast %cst_3 : f32 to vector<128x128xf32>
    %6 = arith.subf %5, %4 : vector<128x128xf32>
    %7 = math.exp %6 : vector<128x128xf32>
    %cst_4 = arith.constant 1.000000e+00 : f32
    %8 = vector.broadcast %cst_4 : f32 to vector<128x128xf32>
    %9 = arith.addf %8, %7 : vector<128x128xf32>
    %10 = tpu.reciprocal %9 {approx = true} : vector<128x128xf32> -> vector<128x128xf32>
    %11 = arith.mulf %4, %10 : vector<128x128xf32>
    %12 = arith.mulf %3, %11 : vector<128x128xf32>
    %c0_5 = arith.constant 0 : index
    %c0_6 = arith.constant 0 : index
    %13 = vector.load %arg4[%c0_5, %c0_6] : memref<128x128xf32, #tpu.memory_space<vmem>>, vector<128x128xf32>
    %cst_7 = arith.constant dense<0.000000e+00> : vector<128x128xf32>
    %14 = tpu.matmul %12, %13, %cst_7 {dimension_numbers = #tpu.dot_dimension_numbers<[1], [0], [0], [1], [0, 0, 1, 1], [], []>} : vector<128x128xf32>, vector<128x128xf32>, vector<128x128xf32> -> vector<128x128xf32>
    %c0_i32 = arith.constant 0 : i32
    %15 = arith.cmpi eq, %arg1, %c0_i32 : i32
    %16 = arith.extui %15 : i1 to i32
    %c0_i32_8 = arith.constant 0 : i32
    %17 = arith.cmpi ne, %16, %c0_i32_8 : i32
    scf.if %17 {
      %c0_12 = arith.constant 0 : index
      %c0_13 = arith.constant 0 : index
      %24 = vector.load %arg6[%c0_12, %c0_13] : memref<128x128xf32, #tpu.memory_space<vmem>>, vector<128x128xf32>
      tpu.vector_store %arg6[%c0_12, %c0_13], %14 {strides = array<i32>} : memref<128x128xf32, #tpu.memory_space<vmem>>, vector<128x128xf32>,
    } else {
    }
    %c0_i32_9 = arith.constant 0 : i32
    %18 = arith.cmpi sgt, %arg1, %c0_i32_9 : i32
    %19 = arith.extui %18 : i1 to i32
    %c0_i32_10 = arith.constant 0 : i32
    %20 = arith.cmpi ne, %19, %c0_i32_10 : i32
    scf.if %20 {
      %c0_12 = arith.constant 0 : index
      %c0_13 = arith.constant 0 : index
      %24 = vector.load %arg6[%c0_12, %c0_13] : memref<128x128xf32, #tpu.memory_space<vmem>>, vector<128x128xf32>
      %25 = arith.addf %24, %14 : vector<128x128xf32>
      %c0_14 = arith.constant 0 : index
      %c0_15 = arith.constant 0 : index
      %26 = vector.load %arg6[%c0_14, %c0_15] : memref<128x128xf32, #tpu.memory_space<vmem>>, vector<128x128xf32>
      tpu.vector_store %arg6[%c0_14, %c0_15], %25 {strides = array<i32>} : memref<128x128xf32, #tpu.memory_space<vmem>>, vector<128x128xf32>,
    } else {
    }
    %c1_i32 = arith.constant 1 : i32
    %21 = arith.cmpi eq, %arg1, %c1_i32 : i32
    %22 = arith.extui %21 : i1 to i32
    %c0_i32_11 = arith.constant 0 : i32
    %23 = arith.cmpi ne, %22, %c0_i32_11 : i32
    scf.if %23 {
      %c0_12 = arith.constant 0 : index
      %c0_13 = arith.constant 0 : index
      %24 = vector.load %arg6[%c0_12, %c0_13] : memref<128x128xf32, #tpu.memory_space<vmem>>, vector<128x128xf32>
      %c0_14 = arith.constant 0 : index
      %c0_15 = arith.constant 0 : index
      %25 = vector.load %arg5[%c0_14, %c0_15] : memref<128x128xf32, #tpu.memory_space<vmem>>, vector<128x128xf32>
      tpu.vector_store %arg5[%c0_14, %c0_15], %24 {strides = array<i32>} : memref<128x128xf32, #tpu.memory_space<vmem>>, vector<128x128xf32>,
    } else {
    }
    return
  }
  func.func @transform_0(%arg0: i32, %arg1: i32) -> (i32, i32) {
    %c0_i32 = arith.constant 0 : i32
    %c0_i32_0 = arith.constant 0 : i32
    return %arg0, %c0_i32 : i32, i32
  }
  func.func @transform_1(%arg0: i32, %arg1: i32) -> (i32, i32) {
    %c0_i32 = arith.constant 0 : i32
    %c0_i32_0 = arith.constant 0 : i32
    return %c0_i32, %arg1 : i32, i32
  }
  func.func @transform_2(%arg0: i32, %arg1: i32) -> (i32, i32) {
    %c0_i32 = arith.constant 0 : i32
    %c0_i32_0 = arith.constant 0 : i32
    return %arg1, %c0_i32 : i32, i32
  }
  func.func @transform_3(%arg0: i32, %arg1: i32) -> (i32, i32) {
    %c0_i32 = arith.constant 0 : i32
    %c0_i32_0 = arith.constant 0 : i32
    return %arg0, %c0_i32 : i32, i32
  }
}

</mosaic_0001>

<llo_original>
// kernel: tpu_custom_call.1
$region0: #{tpu_custom_call.1}
  #allocation0 [shape = 'u32[]', space=smem, size = 0x4, offset = 0x4, fixed_abs, tag = 'smem constant byte address 0x4 - core index']
  #allocation1 [shape = 'u32[72,128]{1,0:T(1,128)}', space=vmem, size = 0x9000, scoped, tag = 'internal scratch']
  #allocation2 [shape = 'f32[128,128]{1,0:T(8,128)}', space=vmem, size = 0x10000, scoped, tag = 'scratch operand']
  %s0 = inlined_call_operand.hbm [shape: f32[256,128], index: 0, kind: input, shape index: {}]
  %s1 = inlined_call_operand.hbm [shape: f32[128,512], index: 1, kind: input, shape index: {}]
  %s2 = inlined_call_operand.hbm [shape: f32[256,128], index: 2, kind: input, shape index: {}]
  %s3 = inlined_call_operand.hbm [shape: f32[256,128], index: 3, kind: output, shape index: {}]
  %s4 = sld [smem:[#allocation0]]
  $region69: #{tpu_custom_call.1} parent=0
    _
  %s6 = ssub.s32 1, %s4
  %s7 = scalar_select 0, %s6, %s4
  $region1: #{tpu_custom_call.1} parent=0
    #allocation3 [shape = 'u8[131072]{0}', space=vmem, size = 0x20000, scoped, tag = 'input window, operand 0']
    #allocation4 [shape = 's32[2]{0}', space=sflag, size = 0x8, scoped, tag = 'scoped memory for tpu_custom_call.1']
    #allocation5 [shape = 's32[2]{0}', space=sflag, size = 0x8, scoped, tag = 'scoped memory for tpu_custom_call.1']
    #allocation6 [shape = 'u8[262144]{0}', space=vmem, size = 0x40000, scoped, tag = 'input window, operand 1']
    #allocation7 [shape = 's32[2]{0}', space=sflag, size = 0x8, scoped, tag = 'scoped memory for tpu_custom_call.1']
    #allocation8 [shape = 'u8[131072]{0}', space=vmem, size = 0x20000, scoped, tag = 'input window, operand 2']
    #allocation9 [shape = 'u8[131072]{0}', space=vmem, size = 0x20000, scoped, tag = 'output window, operand 0']
    %8 = vsyncpa [#allocation4], 0
    %s9 = scalar_lea.sflag [#allocation4], 1
    %10 = vsyncpa %s9, 0
    %11 = vsyncpa [#allocation7], 0
    %s12 = scalar_lea.sflag [#allocation7], 1
    %13 = vsyncpa %s12, 0
    %14 = vsyncpa [#allocation5], 0
    %s15 = scalar_lea.sflag [#allocation5], 1
    %16 = vsyncpa %s15, 0
    loop: start=0, step=1, limit=6
    $region2: #{tpu_custom_call.1} parent=1 // loop_pre_header
      _
    $region3: #{tpu_custom_call.1} parent=1 // loop_header
      %s18 = sphi 0, %s22
      %p19 = scmp.ge.s32.totalorder %s18, 6
      %s25 = sphi 0, %s37
      %s26 = sphi 0, %s33
      %s27 = sphi 0, %s25
      %s28 = sphi 0, %s26
      %s29 = sphi 0, %s27
      %s30 = sphi 0, %s28
      %s40 = sphi 0, %s42
      %s43 = sphi 0, %s40
      %s44 = sphi 0, %s43
      %s60 = sphi 0, %s44
      %s66 = sphi 0, %s68
      %s69 = sphi 0, %s66
      %s70 = sphi 0, %s69
      %s86 = sphi 0, %s70
      %s92 = sphi 0, %s94
      %s95 = sphi 0, %s92
      %s96 = sphi 0, %s95
      %s112 = sphi 0, %s96
      %s118 = sphi 0, %s120
      %s121 = sphi 0, %s118
      %s122 = sphi 0, %s121
      %s138 = sphi 0, %s122
    $region4: #{tpu_custom_call.1} parent=1 // loop_header_branch
      %21 = sbr.rel (%p19) target = $region8
    $region5: #{tpu_custom_call.1} parent=1 // loop_body
      %s23 = ssub.s32 %s18, 1
      %s24 = ssub.s32 %s18, 2
      %s31 = sadd.s32 1, %s26
      %p32 = scmp.ge.s32.totalorder %s31, 2
      %s33 = scalar_select %p32, 0, %s31
      %s34 = sadd.s32 1, %s25
      %s35 = scalar_select %p32, %s34, %s25
      %p36 = scmp.ge.s32.totalorder %s35, 2
      %s37 = scalar_select %p36, 0, %s35
      %s38 = ssub.s32 %s25, %s37
      %p39 = scmp.eq.s32.totalorder %s38, 0
      %s41 = sadd.s32 %s40, 1
      %s42 = scalar_select %p39, %s40, %s41
      %p45 = pneg %p39
      %p46 = scmp.eq.s32.totalorder %s18, 3
      %p47 = por %p45, %p46
      %p48 = scmp.ne.s32.totalorder %s40, %s43
      %p49 = scmp.eq.s32.totalorder %s18, 0
      %p50 = por %p48, %p49
      %p51 = scmp.ne.s32.totalorder %s40, %s43
      %p52 = scmp.eq.s32.totalorder %s23, 3
      %p53 = por %p51, %p52
      %p54 = scmp.ne.s32.totalorder %s43, %s44
      %p55 = scmp.eq.s32.totalorder %s23, 0
      %p56 = por %p54, %p55
      %p57 = scmp.ne.s32.totalorder %s43, %s44
      %p58 = scmp.eq.s32.totalorder %s24, 3
      %p59 = por %p57, %p58
      %p61 = scmp.ne.s32.totalorder %s44, %s60
      %p62 = scmp.eq.s32.totalorder %s24, 0
      %p63 = por %p61, %p62
      %s64 = ssub.s32 %s26, %s33
      %p65 = scmp.eq.s32.totalorder %s64, 0
      %s67 = sadd.s32 %s66, 1
      %s68 = scalar_select %p65, %s66, %s67
      %p71 = pneg %p65
      %p72 = scmp.eq.s32.totalorder %s18, 3
      %p73 = por %p71, %p72
      %p74 = scmp.ne.s32.totalorder %s66, %s69
      %p75 = scmp.eq.s32.totalorder %s18, 0
      %p76 = por %p74, %p75
      %p77 = scmp.ne.s32.totalorder %s66, %s69
      %p78 = scmp.eq.s32.totalorder %s23, 3
      %p79 = por %p77, %p78
      %p80 = scmp.ne.s32.totalorder %s69, %s70
      %p81 = scmp.eq.s32.totalorder %s23, 0
      %p82 = por %p80, %p81
      %p83 = scmp.ne.s32.totalorder %s69, %s70
      %p84 = scmp.eq.s32.totalorder %s24, 3
      %p85 = por %p83, %p84
      %p87 = scmp.ne.s32.totalorder %s70, %s86
      %p88 = scmp.eq.s32.totalorder %s24, 0
      %p89 = por %p87, %p88
      %s90 = ssub.s32 %s26, %s33
      %p91 = scmp.eq.s32.totalorder %s90, 0
      %s93 = sadd.s32 %s92, 1
      %s94 = scalar_select %p91, %s92, %s93
      %p97 = pneg %p91
      %p98 = scmp.eq.s32.totalorder %s18, 3
      %p99 = por %p97, %p98
      %p100 = scmp.ne.s32.totalorder %s92, %s95
      %p101 = scmp.eq.s32.totalorder %s18, 0
      %p102 = por %p100, %p101
      %p103 = scmp.ne.s32.totalorder %s92, %s95
      %p104 = scmp.eq.s32.totalorder %s23, 3
      %p105 = por %p103, %p104
      %p106 = scmp.ne.s32.totalorder %s95, %s96
      %p107 = scmp.eq.s32.totalorder %s23, 0
      %p108 = por %p106, %p107
      %p109 = scmp.ne.s32.totalorder %s95, %s96
      %p110 = scmp.eq.s32.totalorder %s24, 3
      %p111 = por %p109, %p110
      %p113 = scmp.ne.s32.totalorder %s96, %s112
      %p114 = scmp.eq.s32.totalorder %s24, 0
      %p115 = por %p113, %p114
      %s116 = ssub.s32 %s25, %s37
      %p117 = scmp.eq.s32.totalorder %s116, 0
      %s119 = sadd.s32 %s118, 1
      %s120 = scalar_select %p117, %s118, %s119
      %p123 = pneg %p117
      %p124 = scmp.eq.s32.totalorder %s18, 3
      %p125 = por %p123, %p124
      %p126 = scmp.ne.s32.totalorder %s118, %s121
      %p127 = scmp.eq.s32.totalorder %s18, 0
      %p128 = por %p126, %p127
      %p129 = scmp.ne.s32.totalorder %s118, %s121
      %p130 = scmp.eq.s32.totalorder %s23, 3
      %p131 = por %p129, %p130
      %p132 = scmp.ne.s32.totalorder %s121, %s122
      %p133 = scmp.eq.s32.totalorder %s23, 0
      %p134 = por %p132, %p133
      %p135 = scmp.ne.s32.totalorder %s121, %s122
      %p136 = scmp.eq.s32.totalorder %s24, 3
      %p137 = por %p135, %p136
      %p139 = scmp.ne.s32.totalorder %s122, %s138
      %p140 = scmp.eq.s32.totalorder %s24, 0
      %p141 = por %p139, %p140
      %p142 = scmp.le.s32.totalorder 1, %s18
      %p143 = scmp.lt.s32.totalorder %s18, 5
      %p144 = pnand %p142, %p143
      %p145 = pneg %p144
      // Predicated region
      $region9: #{tpu_custom_call.1} parent=5 // pred_check
        _
      $region10: #{tpu_custom_call.1} parent=5 // pred_check_branch
        %147 = sbr.rel (%p144) target = $region12
      $region11: #{tpu_custom_call.1} parent=5 // pred_region
        %s148 = ssub.s32 %s18, 1
      $region12: #{tpu_custom_call.1} parent=5 // pred_fallthru
        _
      %p149 = scmp.lt.s32.totalorder %s18, 4
      // Predicated region
      $region13: #{tpu_custom_call.1} parent=5 // pred_check
        %p150 = pneg %p149
      $region14: #{tpu_custom_call.1} parent=5 // pred_check_branch
        %152 = sbr.rel (%p150) target = $region16
      $region15: #{tpu_custom_call.1} parent=5 // pred_region
        // Predicated region
        $region17: #{tpu_custom_call.1} parent=15 // pred_check
          %p153 = pneg %p50
        $region18: #{tpu_custom_call.1} parent=15 // pred_check_branch
          %155 = sbr.rel (%p153) target = $region20
        $region19: #{tpu_custom_call.1} parent=15 // pred_region
          %s156 = sand.u32 %s40, 1
          %s157 = scalar_lea.sflag [#allocation4], %s156
          %s158 = sand.u32 %s40, 1
          %s159 = smul.addr %s158, 128
          %s160 = scalar_lea.vmem [#allocation3], %s159
          %s161 = smul.u32 16, %s25
          %163 = vsyncadd %s157, 0
          %s164 = smul.addr %s161, 8
          %s165 = scalar_lea.hbm %s0, %s164
          %s166 = sshll.u32 %s165, 4
          %s167 = int_to_ptr.hbm [resolvable:$true] %s166
          %s168 = sshll.u32 %s160, 4
          %s169 = int_to_ptr.vmem [resolvable:$true] %s168
          %174 = dma.hbm_to_vmem [thread:$0]  %s167, 2048, %s169, %s157, 128, 128, 8
        $region20: #{tpu_custom_call.1} parent=15 // pred_fallthru
          _
        // Predicated region
        $region21: #{tpu_custom_call.1} parent=15 // pred_check
          %p175 = pneg %p76
        $region22: #{tpu_custom_call.1} parent=15 // pred_check_branch
          %177 = sbr.rel (%p175) target = $region24
        $region23: #{tpu_custom_call.1} parent=15 // pred_region
          %s178 = sand.u32 %s18, 1
          %s179 = scalar_lea.sflag [#allocation7], %s178
          %s180 = sand.u32 %s66, 1
          %s181 = smul.addr %s180, 256
          %s182 = scalar_lea.vmem [#allocation6], %s181
          %s183 = smul.u32 2, %s26
          %185 = vsyncadd %s179, 0
          %s186 = smul.addr %s183, 8
          %s187 = scalar_lea.hbm %s1, %s186
          %s188 = sshll.u32 %s187, 4
          %s189 = int_to_ptr.hbm [resolvable:$true] %s188
          %s190 = sshll.u32 %s182, 4
          %s191 = int_to_ptr.vmem [resolvable:$true] %s190
          %196 = dma.hbm_to_vmem [thread:$0]  %s189, 4096, %s191, %s179, 512, 256, 16
        $region24: #{tpu_custom_call.1} parent=15 // pred_fallthru
          _
        // Predicated region
        $region25: #{tpu_custom_call.1} parent=15 // pred_check
          %p197 = pneg %p102
        $region26: #{tpu_custom_call.1} parent=15 // pred_check_branch
          %199 = sbr.rel (%p197) target = $region28
        $region27: #{tpu_custom_call.1} parent=15 // pred_region
          %s200 = sand.u32 %s18, 1
          %s201 = scalar_lea.sflag [#allocation7], %s200
          %s202 = sand.u32 %s92, 1
          %s203 = smul.addr %s202, 128
          %s204 = scalar_lea.vmem [#allocation8], %s203
          %s205 = smul.u32 16, %s26
          %207 = vsyncadd %s201, 0
          %s208 = smul.addr %s205, 8
          %s209 = scalar_lea.hbm %s2, %s208
          %s210 = sshll.u32 %s209, 4
          %s211 = int_to_ptr.hbm [resolvable:$true] %s210
          %s212 = sshll.u32 %s204, 4
          %s213 = int_to_ptr.vmem [resolvable:$true] %s212
          %218 = dma.hbm_to_vmem [thread:$0]  %s211, 2048, %s213, %s201, 128, 128, 8
        $region28: #{tpu_custom_call.1} parent=15 // pred_fallthru
          _
      $region16: #{tpu_custom_call.1} parent=5 // pred_fallthru
        _
      %p219 = scmp.le.s32.totalorder 1, %s18
      %p220 = scmp.lt.s32.totalorder %s18, 5
      %p221 = pnand %p219, %p220
      %p222 = pneg %p221
      // Predicated region
      $region29: #{tpu_custom_call.1} parent=5 // pred_check
        _
      $region30: #{tpu_custom_call.1} parent=5 // pred_check_branch
        %224 = sbr.rel (%p221) target = $region32
      $region31: #{tpu_custom_call.1} parent=5 // pred_region
        %s225 = ssub.s32 %s18, 1
        %s226 = sand.u32 %s43, 1
        %s227 = scalar_lea.sflag [#allocation4], %s226
        %s228 = sand.u32 %s43, 1
        %s229 = smul.addr %s228, 128
        %s230 = scalar_lea.vmem [#allocation3], %s229
        // Predicated region
        $region33: #{tpu_custom_call.1} parent=31 // pred_check
          %p231 = pneg %p56
        $region34: #{tpu_custom_call.1} parent=31 // pred_check_branch
          %233 = sbr.rel (%p231) target = $region36
        $region35: #{tpu_custom_call.1} parent=31 // pred_region
          %235 = dma.done %s227, 2048
        $region36: #{tpu_custom_call.1} parent=31 // pred_fallthru
          _
        %s236 = sand.u32 %s23, 1
        %s237 = scalar_lea.sflag [#allocation7], %s236
        %s238 = sand.u32 %s69, 1
        %s239 = smul.addr %s238, 256
        %s240 = scalar_lea.vmem [#allocation6], %s239
        // Predicated region
        $region37: #{tpu_custom_call.1} parent=31 // pred_check
          %p241 = pneg %p82
        $region38: #{tpu_custom_call.1} parent=31 // pred_check_branch
          %243 = sbr.rel (%p241) target = $region40
        $region39: #{tpu_custom_call.1} parent=31 // pred_region
          %245 = dma.done %s237, 4096
        $region40: #{tpu_custom_call.1} parent=31 // pred_fallthru
          _
        %s246 = sand.u32 %s23, 1
        %s247 = scalar_lea.sflag [#allocation7], %s246
        %s248 = sand.u32 %s95, 1
        %s249 = smul.addr %s248, 128
        %s250 = scalar_lea.vmem [#allocation8], %s249
        // Predicated region
        $region41: #{tpu_custom_call.1} parent=31 // pred_check
          %p251 = pneg %p108
        $region42: #{tpu_custom_call.1} parent=31 // pred_check_branch
          %253 = sbr.rel (%p251) target = $region44
        $region43: #{tpu_custom_call.1} parent=31 // pred_region
          %255 = dma.done %s247, 2048
        $region44: #{tpu_custom_call.1} parent=31 // pred_fallthru
          _
        %s256 = sand.u32 %s43, 1
        %s257 = scalar_lea.sflag [#allocation4], %s256
        %s258 = sand.u32 %s43, 1
        %s259 = smul.addr %s258, 128
        %s260 = scalar_lea.vmem [#allocation3], %s259
        %p261 = pneg %p56
        %p262 = pneg %p53
        %s263 = sand.u32 %s23, 1
        %s264 = scalar_lea.sflag [#allocation7], %s263
        %s265 = sand.u32 %s69, 1
        %s266 = smul.addr %s265, 256
        %s267 = scalar_lea.vmem [#allocation6], %s266
        %p268 = pneg %p82
        %p269 = pneg %p79
        %s270 = sand.u32 %s23, 1
        %s271 = scalar_lea.sflag [#allocation7], %s270
        %s272 = sand.u32 %s95, 1
        %s273 = smul.addr %s272, 128
        %s274 = scalar_lea.vmem [#allocation8], %s273
        %p275 = pneg %p108
        %p276 = pneg %p105
        %p277 = pneg %p134
        %p278 = pneg %p131
        %s279 = sand.u32 %s121, 1
        %s280 = scalar_lea.sflag [#allocation5], %s279
        %s281 = sand.u32 %s121, 1
        %s282 = smul.addr %s281, 128
        %s283 = scalar_lea.vmem [#allocation9], %s282
        %s284 = smul.u32 16, %s27
        %s285 = smul.u32 2, %s28
        %s286 = smul.u32 16, %s28
        %s287 = smul.u32 16, %s27
        %v288 = vld [vmem:[%s230] sm:$0xff]
        %v289 = vld [vmem:[%s230 + $0x8] sm:$0xff]
        %v290 = vld [vmem:[%s230 + $0x10] sm:$0xff]
        %v291 = vld [vmem:[%s230 + $0x18] sm:$0xff]
        %v292 = vld [vmem:[%s230 + $0x20] sm:$0xff]
        %v293 = vld [vmem:[%s230 + $0x28] sm:$0xff]
        %v294 = vld [vmem:[%s230 + $0x30] sm:$0xff]
        %v295 = vld [vmem:[%s230 + $0x38] sm:$0xff]
        %v296 = vld [vmem:[%s230 + $0x40] sm:$0xff]
        %v297 = vld [vmem:[%s230 + $0x48] sm:$0xff]
        %v298 = vld [vmem:[%s230 + $0x50] sm:$0xff]
        %v299 = vld [vmem:[%s230 + $0x58] sm:$0xff]
        %v300 = vld [vmem:[%s230 + $0x60] sm:$0xff]
        %v301 = vld [vmem:[%s230 + $0x68] sm:$0xff]
        %v302 = vld [vmem:[%s230 + $0x70] sm:$0xff]
        %v303 = vld [vmem:[%s230 + $0x78] sm:$0xff]
        %v304 = vld [vmem:[%s240] sm:$0xff]
        %v305 = vld [vmem:[%s240 + $0x8] sm:$0xff]
        %v306 = vld [vmem:[%s240 + $0x10] sm:$0xff]
        %v307 = vld [vmem:[%s240 + $0x18] sm:$0xff]
        %v308 = vld [vmem:[%s240 + $0x20] sm:$0xff]
        %v309 = vld [vmem:[%s240 + $0x28] sm:$0xff]
        %v310 = vld [vmem:[%s240 + $0x30] sm:$0xff]
        %v311 = vld [vmem:[%s240 + $0x38] sm:$0xff]
        %v312 = vld [vmem:[%s240 + $0x40] sm:$0xff]
        %v313 = vld [vmem:[%s240 + $0x48] sm:$0xff]
        %v314 = vld [vmem:[%s240 + $0x50] sm:$0xff]
        %v315 = vld [vmem:[%s240 + $0x58] sm:$0xff]
        %v316 = vld [vmem:[%s240 + $0x60] sm:$0xff]
        %v317 = vld [vmem:[%s240 + $0x68] sm:$0xff]
        %v318 = vld [vmem:[%s240 + $0x70] sm:$0xff]
        %v319 = vld [vmem:[%s240 + $0x78] sm:$0xff]
        %v320 = vld [vmem:[%s240 + $0x80] sm:$0xff]
        %v321 = vld [vmem:[%s240 + $0x88] sm:$0xff]
        %v322 = vld [vmem:[%s240 + $0x90] sm:$0xff]
        %v323 = vld [vmem:[%s240 + $0x98] sm:$0xff]
        %v324 = vld [vmem:[%s240 + $0xa0] sm:$0xff]
        %v325 = vld [vmem:[%s240 + $0xa8] sm:$0xff]
        %v326 = vld [vmem:[%s240 + $0xb0] sm:$0xff]
        %v327 = vld [vmem:[%s240 + $0xb8] sm:$0xff]
        %v328 = vld [vmem:[%s240 + $0xc0] sm:$0xff]
        %v329 = vld [vmem:[%s240 + $0xc8] sm:$0xff]
        %v330 = vld [vmem:[%s240 + $0xd0] sm:$0xff]
        %v331 = vld [vmem:[%s240 + $0xd8] sm:$0xff]
        %v332 = vld [vmem:[%s240 + $0xe0] sm:$0xff]
        %v333 = vld [vmem:[%s240 + $0xe8] sm:$0xff]
        %v334 = vld [vmem:[%s240 + $0xf0] sm:$0xff]
        %v335 = vld [vmem:[%s240 + $0xf8] sm:$0xff]
        %336 = vmatpush.msra.mxu0 %v334
        %337 = vmatpush.msra.mxu0 %v332
        %338 = vmatpush.msra.mxu0 %v330
        %339 = vmatpush.msra.mxu0 %v328
        %340 = vmatpush.msra.mxu0 %v326
        %341 = vmatpush.msra.mxu0 %v324
        %342 = vmatpush.msra.mxu0 %v322
        %343 = vmatpush.msra.mxu0 %v320
        %344 = vmatpush.msra.mxu0 %v318
        %345 = vmatpush.msra.mxu0 %v316
        %346 = vmatpush.msra.mxu0 %v314
        %347 = vmatpush.msra.mxu0 %v312
        %348 = vmatpush.msra.mxu0 %v310
        %349 = vmatpush.msra.mxu0 %v308
        %350 = vmatpush.msra.mxu0 %v306
        %351 = vmatpush.msra.mxu0 %v304
        %352 = vmatmul.f32.gmra.mxu0 %v288
        %v353 = vpop.f32.mrf.mxu0
        %v354 = vadd.f32 0.0, %v353
        %355 = vmatmul.f32.gmra.mxu0 %v289
        %v356 = vpop.f32.mrf.mxu0
        %v357 = vadd.f32 0.0, %v356
        %358 = vmatmul.f32.gmra.mxu0 %v290
        %v359 = vpop.f32.mrf.mxu0
        %v360 = vadd.f32 0.0, %v359
        %361 = vmatmul.f32.gmra.mxu0 %v291
        %v362 = vpop.f32.mrf.mxu0
        %v363 = vadd.f32 0.0, %v362
        %364 = vmatmul.f32.gmra.mxu0 %v292
        %v365 = vpop.f32.mrf.mxu0
        %v366 = vadd.f32 0.0, %v365
        %367 = vmatmul.f32.gmra.mxu0 %v293
        %v368 = vpop.f32.mrf.mxu0
        %v369 = vadd.f32 0.0, %v368
        %370 = vmatmul.f32.gmra.mxu0 %v294
        %v371 = vpop.f32.mrf.mxu0
        %v372 = vadd.f32 0.0, %v371
        %373 = vmatmul.f32.gmra.mxu0 %v295
        %v374 = vpop.f32.mrf.mxu0
        %v375 = vadd.f32 0.0, %v374
        %376 = vmatmul.f32.gmra.mxu0 %v296
        %v377 = vpop.f32.mrf.mxu0
        %v378 = vadd.f32 0.0, %v377
        %379 = vmatmul.f32.gmra.mxu0 %v297
        %v380 = vpop.f32.mrf.mxu0
        %v381 = vadd.f32 0.0, %v380
        %382 = vmatmul.f32.gmra.mxu0 %v298
        %v383 = vpop.f32.mrf.mxu0
        %v384 = vadd.f32 0.0, %v383
        %385 = vmatmul.f32.gmra.mxu0 %v299
        %v386 = vpop.f32.mrf.mxu0
        %v387 = vadd.f32 0.0, %v386
        %388 = vmatmul.f32.gmra.mxu0 %v300
        %v389 = vpop.f32.mrf.mxu0
        %v390 = vadd.f32 0.0, %v389
        %391 = vmatmul.f32.gmra.mxu0 %v301
        %v392 = vpop.f32.mrf.mxu0
        %v393 = vadd.f32 0.0, %v392
        %394 = vmatmul.f32.gmra.mxu0 %v302
        %v395 = vpop.f32.mrf.mxu0
        %v396 = vadd.f32 0.0, %v395
        %397 = vmatmul.f32.gmra.mxu0 %v303
        %v398 = vpop.f32.mrf.mxu0
        %v399 = vadd.f32 0.0, %v398
        %400 = vdwg.mxu0
        %401 = vmatpush.msra.mxu0 %v335
        %402 = vmatpush.msra.mxu0 %v333
        %403 = vmatpush.msra.mxu0 %v331
        %404 = vmatpush.msra.mxu0 %v329
        %405 = vmatpush.msra.mxu0 %v327
        %406 = vmatpush.msra.mxu0 %v325
        %407 = vmatpush.msra.mxu0 %v323
        %408 = vmatpush.msra.mxu0 %v321
        %409 = vmatpush.msra.mxu0 %v319
        %410 = vmatpush.msra.mxu0 %v317
        %411 = vmatpush.msra.mxu0 %v315
        %412 = vmatpush.msra.mxu0 %v313
        %413 = vmatpush.msra.mxu0 %v311
        %414 = vmatpush.msra.mxu0 %v309
        %415 = vmatpush.msra.mxu0 %v307
        %416 = vmatpush.msra.mxu0 %v305
        %417 = vmatmul.f32.gmra.mxu0 %v288
        %v418 = vpop.f32.mrf.mxu0
        %v419 = vadd.f32 0.0, %v418
        %420 = vmatmul.f32.gmra.mxu0 %v289
        %v421 = vpop.f32.mrf.mxu0
        %v422 = vadd.f32 0.0, %v421
        %423 = vmatmul.f32.gmra.mxu0 %v290
        %v424 = vpop.f32.mrf.mxu0
        %v425 = vadd.f32 0.0, %v424
        %426 = vmatmul.f32.gmra.mxu0 %v291
        %v427 = vpop.f32.mrf.mxu0
        %v428 = vadd.f32 0.0, %v427
        %429 = vmatmul.f32.gmra.mxu0 %v292
        %v430 = vpop.f32.mrf.mxu0
        %v431 = vadd.f32 0.0, %v430
        %432 = vmatmul.f32.gmra.mxu0 %v293
        %v433 = vpop.f32.mrf.mxu0
        %v434 = vadd.f32 0.0, %v433
        %435 = vmatmul.f32.gmra.mxu0 %v294
        %v436 = vpop.f32.mrf.mxu0
        %v437 = vadd.f32 0.0, %v436
        %438 = vmatmul.f32.gmra.mxu0 %v295
        %v439 = vpop.f32.mrf.mxu0
        %v440 = vadd.f32 0.0, %v439
        %441 = vmatmul.f32.gmra.mxu0 %v296
        %v442 = vpop.f32.mrf.mxu0
        %v443 = vadd.f32 0.0, %v442
        %444 = vmatmul.f32.gmra.mxu0 %v297
        %v445 = vpop.f32.mrf.mxu0
        %v446 = vadd.f32 0.0, %v445
        %447 = vmatmul.f32.gmra.mxu0 %v298
        %v448 = vpop.f32.mrf.mxu0
        %v449 = vadd.f32 0.0, %v448
        %450 = vmatmul.f32.gmra.mxu0 %v299
        %v451 = vpop.f32.mrf.mxu0
        %v452 = vadd.f32 0.0, %v451
        %453 = vmatmul.f32.gmra.mxu0 %v300
        %v454 = vpop.f32.mrf.mxu0
        %v455 = vadd.f32 0.0, %v454
        %456 = vmatmul.f32.gmra.mxu0 %v301
        %v457 = vpop.f32.mrf.mxu0
        %v458 = vadd.f32 0.0, %v457
        %459 = vmatmul.f32.gmra.mxu0 %v302
        %v460 = vpop.f32.mrf.mxu0
        %v461 = vadd.f32 0.0, %v460
        %462 = vmatmul.f32.gmra.mxu0 %v303
        %v463 = vpop.f32.mrf.mxu0
        %v464 = vadd.f32 0.0, %v463
        %465 = vdwg.mxu0
        %v466 = vsub.f32 0.0, %v419
        %v467 = vsub.f32 0.0, %v422
        %v468 = vsub.f32 0.0, %v425
        %v469 = vsub.f32 0.0, %v428
        %v470 = vsub.f32 0.0, %v431
        %v471 = vsub.f32 0.0, %v434
        %v472 = vsub.f32 0.0, %v437
        %v473 = vsub.f32 0.0, %v440
        %v474 = vsub.f32 0.0, %v443
        %v475 = vsub.f32 0.0, %v446
        %v476 = vsub.f32 0.0, %v449
        %v477 = vsub.f32 0.0, %v452
        %v478 = vsub.f32 0.0, %v455
        %v479 = vsub.f32 0.0, %v458
        %v480 = vsub.f32 0.0, %v461
        %v481 = vsub.f32 0.0, %v464
        %v482 = vmul.f32 %v466, 1.442695
        %v483 = vpow.pop %v482
        %v484 = vmul.f32 %v467, 1.442695
        %v485 = vpow.pop %v484
        %v486 = vmul.f32 %v468, 1.442695
        %v487 = vpow.pop %v486
        %v488 = vmul.f32 %v469, 1.442695
        %v489 = vpow.pop %v488
        %v490 = vmul.f32 %v470, 1.442695
        %v491 = vpow.pop %v490
        %v492 = vmul.f32 %v471, 1.442695
        %v493 = vpow.pop %v492
        %v494 = vmul.f32 %v472, 1.442695
        %v495 = vpow.pop %v494
        %v496 = vmul.f32 %v473, 1.442695
        %v497 = vpow.pop %v496
        %v498 = vmul.f32 %v474, 1.442695
        %v499 = vpow.pop %v498
        %v500 = vmul.f32 %v475, 1.442695
        %v501 = vpow.pop %v500
        %v502 = vmul.f32 %v476, 1.442695
        %v503 = vpow.pop %v502
        %v504 = vmul.f32 %v477, 1.442695
        %v505 = vpow.pop %v504
        %v506 = vmul.f32 %v478, 1.442695
        %v507 = vpow.pop %v506
        %v508 = vmul.f32 %v479, 1.442695
        %v509 = vpow.pop %v508
        %v510 = vmul.f32 %v480, 1.442695
        %v511 = vpow.pop %v510
        %v512 = vmul.f32 %v481, 1.442695
        %v513 = vpow.pop %v512
        %v514 = vadd.f32 %v483, 1.0
        %v515 = vadd.f32 %v485, 1.0
        %v516 = vadd.f32 %v487, 1.0
        %v517 = vadd.f32 %v489, 1.0
        %v518 = vadd.f32 %v491, 1.0
        %v519 = vadd.f32 %v493, 1.0
        %v520 = vadd.f32 %v495, 1.0
        %v521 = vadd.f32 %v497, 1.0
        %v522 = vadd.f32 %v499, 1.0
        %v523 = vadd.f32 %v501, 1.0
        %v524 = vadd.f32 %v503, 1.0
        %v525 = vadd.f32 %v505, 1.0
        %v526 = vadd.f32 %v507, 1.0
        %v527 = vadd.f32 %v509, 1.0
        %v528 = vadd.f32 %v511, 1.0
        %v529 = vadd.f32 %v513, 1.0
        %v530 = vrcp.pop %v514
        %v531 = vrcp.pop %v515
        %v532 = vrcp.pop %v516
        %v533 = vrcp.pop %v517
        %v534 = vrcp.pop %v518
        %v535 = vrcp.pop %v519
        %v536 = vrcp.pop %v520
        %v537 = vrcp.pop %v521
        %v538 = vrcp.pop %v522
        %v539 = vrcp.pop %v523
        %v540 = vrcp.pop %v524
        %v541 = vrcp.pop %v525
        %v542 = vrcp.pop %v526
        %v543 = vrcp.pop %v527
        %v544 = vrcp.pop %v528
        %v545 = vrcp.pop %v529
        %v546 = vmul.f32 %v419, %v530
        %v547 = vmul.f32 %v422, %v531
        %v548 = vmul.f32 %v425, %v532
        %v549 = vmul.f32 %v428, %v533
        %v550 = vmul.f32 %v431, %v534
        %v551 = vmul.f32 %v434, %v535
        %v552 = vmul.f32 %v437, %v536
        %v553 = vmul.f32 %v440, %v537
        %v554 = vmul.f32 %v443, %v538
        %v555 = vmul.f32 %v446, %v539
        %v556 = vmul.f32 %v449, %v540
        %v557 = vmul.f32 %v452, %v541
        %v558 = vmul.f32 %v455, %v542
        %v559 = vmul.f32 %v458, %v543
        %v560 = vmul.f32 %v461, %v544
        %v561 = vmul.f32 %v464, %v545
        %v562 = vmul.f32 %v354, %v546
        %v563 = vmul.f32 %v357, %v547
        %v564 = vmul.f32 %v360, %v548
        %v565 = vmul.f32 %v363, %v549
        %v566 = vmul.f32 %v366, %v550
        %v567 = vmul.f32 %v369, %v551
        %v568 = vmul.f32 %v372, %v552
        %v569 = vmul.f32 %v375, %v553
        %v570 = vmul.f32 %v378, %v554
        %v571 = vmul.f32 %v381, %v555
        %v572 = vmul.f32 %v384, %v556
        %v573 = vmul.f32 %v387, %v557
        %v574 = vmul.f32 %v390, %v558
        %v575 = vmul.f32 %v393, %v559
        %v576 = vmul.f32 %v396, %v560
        %v577 = vmul.f32 %v399, %v561
        %v578 = vld [vmem:[%s250] sm:$0xff]
        %v579 = vld [vmem:[%s250 + $0x8] sm:$0xff]
        %v580 = vld [vmem:[%s250 + $0x10] sm:$0xff]
        %v581 = vld [vmem:[%s250 + $0x18] sm:$0xff]
        %v582 = vld [vmem:[%s250 + $0x20] sm:$0xff]
        %v583 = vld [vmem:[%s250 + $0x28] sm:$0xff]
        %v584 = vld [vmem:[%s250 + $0x30] sm:$0xff]
        %v585 = vld [vmem:[%s250 + $0x38] sm:$0xff]
        %v586 = vld [vmem:[%s250 + $0x40] sm:$0xff]
        %v587 = vld [vmem:[%s250 + $0x48] sm:$0xff]
        %v588 = vld [vmem:[%s250 + $0x50] sm:$0xff]
        %v589 = vld [vmem:[%s250 + $0x58] sm:$0xff]
        %v590 = vld [vmem:[%s250 + $0x60] sm:$0xff]
        %v591 = vld [vmem:[%s250 + $0x68] sm:$0xff]
        %v592 = vld [vmem:[%s250 + $0x70] sm:$0xff]
        %v593 = vld [vmem:[%s250 + $0x78] sm:$0xff]
        %594 = vmatpush.msra.mxu0 %v593
        %595 = vmatpush.msra.mxu0 %v592
        %596 = vmatpush.msra.mxu0 %v591
        %597 = vmatpush.msra.mxu0 %v590
        %598 = vmatpush.msra.mxu0 %v589
        %599 = vmatpush.msra.mxu0 %v588
        %600 = vmatpush.msra.mxu0 %v587
        %601 = vmatpush.msra.mxu0 %v586
        %602 = vmatpush.msra.mxu0 %v585
        %603 = vmatpush.msra.mxu0 %v584
        %604 = vmatpush.msra.mxu0 %v583
        %605 = vmatpush.msra.mxu0 %v582
        %606 = vmatpush.msra.mxu0 %v581
        %607 = vmatpush.msra.mxu0 %v580
        %608 = vmatpush.msra.mxu0 %v579
        %609 = vmatpush.msra.mxu0 %v578
        %610 = vmatmul.f32.gmra.mxu0 %v562
        %v611 = vpop.f32.mrf.mxu0
        %v612 = vadd.f32 0.0, %v611
        %613 = vmatmul.f32.gmra.mxu0 %v563
        %v614 = vpop.f32.mrf.mxu0
        %v615 = vadd.f32 0.0, %v614
        %616 = vmatmul.f32.gmra.mxu0 %v564
        %v617 = vpop.f32.mrf.mxu0
        %v618 = vadd.f32 0.0, %v617
        %619 = vmatmul.f32.gmra.mxu0 %v565
        %v620 = vpop.f32.mrf.mxu0
        %v621 = vadd.f32 0.0, %v620
        %622 = vmatmul.f32.gmra.mxu0 %v566
        %v623 = vpop.f32.mrf.mxu0
        %v624 = vadd.f32 0.0, %v623
        %625 = vmatmul.f32.gmra.mxu0 %v567
        %v626 = vpop.f32.mrf.mxu0
        %v627 = vadd.f32 0.0, %v626
        %628 = vmatmul.f32.gmra.mxu0 %v568
        %v629 = vpop.f32.mrf.mxu0
        %v630 = vadd.f32 0.0, %v629
        %631 = vmatmul.f32.gmra.mxu0 %v569
        %v632 = vpop.f32.mrf.mxu0
        %v633 = vadd.f32 0.0, %v632
        %634 = vmatmul.f32.gmra.mxu0 %v570
        %v635 = vpop.f32.mrf.mxu0
        %v636 = vadd.f32 0.0, %v635
        %637 = vmatmul.f32.gmra.mxu0 %v571
        %v638 = vpop.f32.mrf.mxu0
        %v639 = vadd.f32 0.0, %v638
        %640 = vmatmul.f32.gmra.mxu0 %v572
        %v641 = vpop.f32.mrf.mxu0
        %v642 = vadd.f32 0.0, %v641
        %643 = vmatmul.f32.gmra.mxu0 %v573
        %v644 = vpop.f32.mrf.mxu0
        %v645 = vadd.f32 0.0, %v644
        %646 = vmatmul.f32.gmra.mxu0 %v574
        %v647 = vpop.f32.mrf.mxu0
        %v648 = vadd.f32 0.0, %v647
        %649 = vmatmul.f32.gmra.mxu0 %v575
        %v650 = vpop.f32.mrf.mxu0
        %v651 = vadd.f32 0.0, %v650
        %652 = vmatmul.f32.gmra.mxu0 %v576
        %v653 = vpop.f32.mrf.mxu0
        %v654 = vadd.f32 0.0, %v653
        %655 = vmatmul.f32.gmra.mxu0 %v577
        %v656 = vpop.f32.mrf.mxu0
        %v657 = vadd.f32 0.0, %v656
        %658 = vdwg.mxu0
        %p659 = scmp.eq.s32.totalorder %s28, 0
        // Predicated region
        $region45: #{tpu_custom_call.1} parent=31 // pred_check
          %p660 = pneg %p659
        $region46: #{tpu_custom_call.1} parent=31 // pred_check_branch
          %662 = sbr.rel (%p660) target = $region48
        $region47: #{tpu_custom_call.1} parent=31 // pred_region
          %663 = vst [vmem:[#allocation2] sm:$0xff] %v612
          %664 = vst [vmem:[#allocation2 + $0x8] sm:$0xff] %v615
          %665 = vst [vmem:[#allocation2 + $0x10] sm:$0xff] %v618
          %666 = vst [vmem:[#allocation2 + $0x18] sm:$0xff] %v621
          %667 = vst [vmem:[#allocation2 + $0x20] sm:$0xff] %v624
          %668 = vst [vmem:[#allocation2 + $0x28] sm:$0xff] %v627
          %669 = vst [vmem:[#allocation2 + $0x30] sm:$0xff] %v630
          %670 = vst [vmem:[#allocation2 + $0x38] sm:$0xff] %v633
          %671 = vst [vmem:[#allocation2 + $0x40] sm:$0xff] %v636
          %672 = vst [vmem:[#allocation2 + $0x48] sm:$0xff] %v639
          %673 = vst [vmem:[#allocation2 + $0x50] sm:$0xff] %v642
          %674 = vst [vmem:[#allocation2 + $0x58] sm:$0xff] %v645
          %675 = vst [vmem:[#allocation2 + $0x60] sm:$0xff] %v648
          %676 = vst [vmem:[#allocation2 + $0x68] sm:$0xff] %v651
          %677 = vst [vmem:[#allocation2 + $0x70] sm:$0xff] %v654
          %678 = vst [vmem:[#allocation2 + $0x78] sm:$0xff] %v657
        $region48: #{tpu_custom_call.1} parent=31 // pred_fallthru
          _
        %p679 = scmp.gt.s32.totalorder %s28, 0
        // Predicated region
        $region49: #{tpu_custom_call.1} parent=31 // pred_check
          %p680 = pneg %p679
        $region50: #{tpu_custom_call.1} parent=31 // pred_check_branch
          %682 = sbr.rel (%p680) target = $region52
        $region51: #{tpu_custom_call.1} parent=31 // pred_region
          %v683 = vld [vmem:[#allocation2] sm:$0xff]
          %v684 = vld [vmem:[#allocation2 + $0x8] sm:$0xff]
          %v685 = vld [vmem:[#allocation2 + $0x10] sm:$0xff]
          %v686 = vld [vmem:[#allocation2 + $0x18] sm:$0xff]
          %v687 = vld [vmem:[#allocation2 + $0x20] sm:$0xff]
          %v688 = vld [vmem:[#allocation2 + $0x28] sm:$0xff]
          %v689 = vld [vmem:[#allocation2 + $0x30] sm:$0xff]
          %v690 = vld [vmem:[#allocation2 + $0x38] sm:$0xff]
          %v691 = vld [vmem:[#allocation2 + $0x40] sm:$0xff]
          %v692 = vld [vmem:[#allocation2 + $0x48] sm:$0xff]
          %v693 = vld [vmem:[#allocation2 + $0x50] sm:$0xff]
          %v694 = vld [vmem:[#allocation2 + $0x58] sm:$0xff]
          %v695 = vld [vmem:[#allocation2 + $0x60] sm:$0xff]
          %v696 = vld [vmem:[#allocation2 + $0x68] sm:$0xff]
          %v697 = vld [vmem:[#allocation2 + $0x70] sm:$0xff]
          %v698 = vld [vmem:[#allocation2 + $0x78] sm:$0xff]
          %v699 = vadd.f32 %v683, %v612
          %v700 = vadd.f32 %v684, %v615
          %v701 = vadd.f32 %v685, %v618
          %v702 = vadd.f32 %v686, %v621
          %v703 = vadd.f32 %v687, %v624
          %v704 = vadd.f32 %v688, %v627
          %v705 = vadd.f32 %v689, %v630
          %v706 = vadd.f32 %v690, %v633
          %v707 = vadd.f32 %v691, %v636
          %v708 = vadd.f32 %v692, %v639
          %v709 = vadd.f32 %v693, %v642
          %v710 = vadd.f32 %v694, %v645
          %v711 = vadd.f32 %v695, %v648
          %v712 = vadd.f32 %v696, %v651
          %v713 = vadd.f32 %v697, %v654
          %v714 = vadd.f32 %v698, %v657
          %715 = vst [vmem:[#allocation2] sm:$0xff] %v699
          %716 = vst [vmem:[#allocation2 + $0x8] sm:$0xff] %v700
          %717 = vst [vmem:[#allocation2 + $0x10] sm:$0xff] %v701
          %718 = vst [vmem:[#allocation2 + $0x18] sm:$0xff] %v702
          %719 = vst [vmem:[#allocation2 + $0x20] sm:$0xff] %v703
          %720 = vst [vmem:[#allocation2 + $0x28] sm:$0xff] %v704
          %721 = vst [vmem:[#allocation2 + $0x30] sm:$0xff] %v705
          %722 = vst [vmem:[#allocation2 + $0x38] sm:$0xff] %v706
          %723 = vst [vmem:[#allocation2 + $0x40] sm:$0xff] %v707
          %724 = vst [vmem:[#allocation2 + $0x48] sm:$0xff] %v708
          %725 = vst [vmem:[#allocation2 + $0x50] sm:$0xff] %v709
          %726 = vst [vmem:[#allocation2 + $0x58] sm:$0xff] %v710
          %727 = vst [vmem:[#allocation2 + $0x60] sm:$0xff] %v711
          %728 = vst [vmem:[#allocation2 + $0x68] sm:$0xff] %v712
          %729 = vst [vmem:[#allocation2 + $0x70] sm:$0xff] %v713
          %730 = vst [vmem:[#allocation2 + $0x78] sm:$0xff] %v714
        $region52: #{tpu_custom_call.1} parent=31 // pred_fallthru
          _
        %p731 = scmp.eq.s32.totalorder %s28, 1
        // Predicated region
        $region53: #{tpu_custom_call.1} parent=31 // pred_check
          %p732 = pneg %p731
        $region54: #{tpu_custom_call.1} parent=31 // pred_check_branch
          %734 = sbr.rel (%p732) target = $region56
        $region55: #{tpu_custom_call.1} parent=31 // pred_region
          %v735 = vld [vmem:[#allocation2] sm:$0xff]
          %v736 = vld [vmem:[#allocation2 + $0x8] sm:$0xff]
          %v737 = vld [vmem:[#allocation2 + $0x10] sm:$0xff]
          %v738 = vld [vmem:[#allocation2 + $0x18] sm:$0xff]
          %v739 = vld [vmem:[#allocation2 + $0x20] sm:$0xff]
          %v740 = vld [vmem:[#allocation2 + $0x28] sm:$0xff]
          %v741 = vld [vmem:[#allocation2 + $0x30] sm:$0xff]
          %v742 = vld [vmem:[#allocation2 + $0x38] sm:$0xff]
          %v743 = vld [vmem:[#allocation2 + $0x40] sm:$0xff]
          %v744 = vld [vmem:[#allocation2 + $0x48] sm:$0xff]
          %v745 = vld [vmem:[#allocation2 + $0x50] sm:$0xff]
          %v746 = vld [vmem:[#allocation2 + $0x58] sm:$0xff]
          %v747 = vld [vmem:[#allocation2 + $0x60] sm:$0xff]
          %v748 = vld [vmem:[#allocation2 + $0x68] sm:$0xff]
          %v749 = vld [vmem:[#allocation2 + $0x70] sm:$0xff]
          %v750 = vld [vmem:[#allocation2 + $0x78] sm:$0xff]
          %751 = vst [vmem:[%s283] sm:$0xff] %v735
          %752 = vst [vmem:[%s283 + $0x8] sm:$0xff] %v736
          %753 = vst [vmem:[%s283 + $0x10] sm:$0xff] %v737
          %754 = vst [vmem:[%s283 + $0x18] sm:$0xff] %v738
          %755 = vst [vmem:[%s283 + $0x20] sm:$0xff] %v739
          %756 = vst [vmem:[%s283 + $0x28] sm:$0xff] %v740
          %757 = vst [vmem:[%s283 + $0x30] sm:$0xff] %v741
          %758 = vst [vmem:[%s283 + $0x38] sm:$0xff] %v742
          %759 = vst [vmem:[%s283 + $0x40] sm:$0xff] %v743
          %760 = vst [vmem:[%s283 + $0x48] sm:$0xff] %v744
          %761 = vst [vmem:[%s283 + $0x50] sm:$0xff] %v745
          %762 = vst [vmem:[%s283 + $0x58] sm:$0xff] %v746
          %763 = vst [vmem:[%s283 + $0x60] sm:$0xff] %v747
          %764 = vst [vmem:[%s283 + $0x68] sm:$0xff] %v748
          %765 = vst [vmem:[%s283 + $0x70] sm:$0xff] %v749
          %766 = vst [vmem:[%s283 + $0x78] sm:$0xff] %v750
        $region56: #{tpu_custom_call.1} parent=31 // pred_fallthru
          _
        %s767 = sand.u32 %s121, 1
        %s768 = scalar_lea.sflag [#allocation5], %s767
        %s769 = sand.u32 %s121, 1
        %s770 = smul.addr %s769, 128
        %s771 = scalar_lea.vmem [#allocation9], %s770
        // Predicated region
        $region57: #{tpu_custom_call.1} parent=31 // pred_check
          %p772 = pneg %p131
        $region58: #{tpu_custom_call.1} parent=31 // pred_check_branch
          %774 = sbr.rel (%p772) target = $region60
        $region59: #{tpu_custom_call.1} parent=31 // pred_region
          %s775 = smul.u32 16, %s27
          %777 = vsyncadd %s768, 0
          %s778 = smul.addr %s775, 8
          %s779 = scalar_lea.hbm %s3, %s778
          %s780 = sshll.u32 %s771, 4
          %s781 = int_to_ptr.vmem [resolvable:$true] %s780
          %s782 = sshll.u32 %s779, 4
          %s783 = int_to_ptr.hbm [resolvable:$true] %s782
          %788 = dma.vmem_to_hbm [thread:$0]  %s781, 2048, %s783, %s768, 128, 128, 8
        $region60: #{tpu_custom_call.1} parent=31 // pred_fallthru
          _
      $region32: #{tpu_custom_call.1} parent=5 // pred_fallthru
        _
      %p789 = scmp.le.s32.totalorder 2, %s18
      // Predicated region
      $region61: #{tpu_custom_call.1} parent=5 // pred_check
        %p790 = pneg %p789
      $region62: #{tpu_custom_call.1} parent=5 // pred_check_branch
        %792 = sbr.rel (%p790) target = $region64
      $region63: #{tpu_custom_call.1} parent=5 // pred_region
        %s793 = ssub.s32 %s18, 2
        // Predicated region
        $region65: #{tpu_custom_call.1} parent=63 // pred_check
          %p794 = pneg %p137
        $region66: #{tpu_custom_call.1} parent=63 // pred_check_branch
          %796 = sbr.rel (%p794) target = $region68
        $region67: #{tpu_custom_call.1} parent=63 // pred_region
          %s797 = sand.u32 %s122, 1
          %s798 = scalar_lea.sflag [#allocation5], %s797
          %s799 = sand.u32 %s122, 1
          %s800 = smul.addr %s799, 128
          %s801 = scalar_lea.vmem [#allocation9], %s800
          %803 = dma.done %s798, 2048
        $region68: #{tpu_custom_call.1} parent=63 // pred_fallthru
          _
      $region64: #{tpu_custom_call.1} parent=5 // pred_fallthru
        _
    $region6: #{tpu_custom_call.1} parent=1 // loop_footer
      %s22 = sadd.s32 1, %s18
    $region7: #{tpu_custom_call.1} parent=1 // loop_footer_branch
      %17 = sbr.rel target = $region3
    $region8: #{tpu_custom_call.1} parent=1 // loop_exit
      _
    %804 = vsyncpa [#allocation4], 1
    %s805 = scalar_lea.sflag [#allocation4], 1
    %806 = vsyncpa %s805, 1
    %807 = vsyncpa [#allocation7], 1
    %s808 = scalar_lea.sflag [#allocation7], 1
    %809 = vsyncpa %s808, 1
    %810 = vsyncpa [#allocation5], 1
    %s811 = scalar_lea.sflag [#allocation5], 1
    %812 = vsyncpa %s811, 1

</llo_original>
